<compile_context>
chip_gen: v7x
topology: tpu7x:2x2x1
jax: 0.10.0
libtpu: 0.0.40
codegen_flags: <defaults>
</compile_context>

<pallas_src>
import functools

import jax
import jax.numpy as jnp
from jax import lax
from jax.experimental import pallas as pl
from jax.experimental.pallas import tpu as pltpu


def _round_up(a, b):
    return -(-a // b) * b


def _tpu_vmem_and_cores():
    """Best-effort generation detection: (physical VMEM bytes, #TensorCores per chip)."""
    cap = 64 * 1024 * 1024   # conservative default (v7x-sized); known-safe limit
    cores = 1
    try:
        kind = jax.devices()[0].device_kind.lower()
        if "v7" in kind or "7x" in kind:
            cap, cores = 64 * 1024 * 1024, 2
        elif "v6" in kind or "v5" in kind or "v4" in kind:
            cap, cores = 128 * 1024 * 1024, 1
    except Exception:
        pass
    return cap, cores


def _vmem_footprint(tm, tc, dp, x_bytes, w_bytes, xn_bytes, wf_bytes, with_wf):
    f = 2 * tm * dp * x_bytes           # x blocks (double-buffered)
    f += 2 * dp * tc * w_bytes          # W.T blocks (streamed over classes)
    f += 2 * tm * 4                     # labels blocks (int32)
    f += 2 * tm * 4                     # per-row loss output blocks
    if with_wf:
        f += 2 * tm * tc * wf_bytes     # wf output blocks
    f += tm * dp * xn_bytes             # normalized-x scratch
    f += 2 * tm * 128 * 4               # lane-wide f32 accumulators
    return f


def _make_kernel(*, s, m, tc, n_pad_classes, with_wf):
    n_lane_groups = tc // 128

    def kernel(x_ref, wt_ref, lbl_ref, *refs):
        if with_wf:
            wf_ref, l_ref, xn_ref, tgt_ref, excl_ref = refs
        else:
            l_ref, xn_ref, tgt_ref, excl_ref = refs
            wf_ref = None

        j = pl.program_id(1)

        # First class tile for this row tile: normalize x once, zero the accumulators.
        @pl.when(j == 0)
        def _init():
            xf = x_ref[...].astype(jnp.float32)                        # (TM, Dp)
            ssq = jnp.sum(xf * xf, axis=1, keepdims=True)
            # One tiny (TM,1) reciprocal + VPU multiply instead of TM*Dp divides.
            inv = 1.0 / jnp.maximum(jnp.sqrt(ssq), 1e-12)              # F.normalize clamp
            xn_ref[...] = (xf * inv).astype(xn_ref.dtype)
            tgt_ref[...] = jnp.zeros_like(tgt_ref)
            excl_ref[...] = jnp.zeros_like(excl_ref)

        # MXU: (TM, Dp) @ (Dp, TC) -> f32 (TM, TC); operands in the compute dtype.
        wf = lax.dot_general(xn_ref[...], wt_ref[...], (((1,), (0,)), ((), ())),
                             preferred_element_type=jnp.float32)
        if with_wf:
            wf_ref[...] = wf.astype(wf_ref.dtype)                      # lane-dense streamed out

        # Target mask for this class tile: local column == label - j*TC.
        col = lax.broadcasted_iota(jnp.int32, wf.shape, 1)             # (TM, TC)
        is_tgt = col == (lbl_ref[...] - j * tc)                        # lbl is (TM, 1) int32

        e = jnp.exp(s * wf)
        masked_e = jnp.where(is_tgt, 0.0, e)       # direct masked exclusion (matches reference)
        masked_t = jnp.where(is_tgt, wf, 0.0)

        # Lane-group partial sums: pure VPU adds each step; the cross-lane (XLU) reduce is
        # deferred to the j==last finalize so it runs once per row tile, not once per step.
        excl_acc = excl_ref[...]
        tgt_acc = tgt_ref[...]
        for g in range(n_lane_groups):             # static, lane-aligned 128-wide chunks
            sl = slice(g * 128, (g + 1) * 128)
            excl_acc = excl_acc + masked_e[:, sl]
            tgt_acc = tgt_acc + masked_t[:, sl]
        excl_ref[...] = excl_acc
        tgt_ref[...] = tgt_acc

        # Last class tile: per-row cosface loss term.
        @pl.when(j == pl.num_programs(1) - 1)
        def _finalize():
            tgt = jnp.sum(tgt_ref[...], axis=1, keepdims=True)         # single XLU reduce
            excl = jnp.sum(excl_ref[...], axis=1, keepdims=True)
            if n_pad_classes:   # padded (all-zero) W columns each contributed exp(0) == 1 exactly
                excl = excl - jnp.float32(n_pad_classes)
            numerator = s * (tgt - m)
            denom = jnp.exp(numerator) + excl
            l_ref[...] = numerator - jnp.log(denom)

    return kernel


@functools.partial(jax.jit, static_argnames=("s", "m", "row_tile", "class_tile",
                                             "compute_dtype", "return_wf"))
def angular_penalty_sm_loss(x, w, labels, *, s=30.0, m=0.4,
                            row_tile=None, class_tile=1024,
                            compute_dtype=None, return_wf=True):
    """x: (N, D); w: (C, D) like nn.Linear weight; labels: (N,) int.
    Returns (loss, wf) like the PyTorch module (cosface); loss only if return_wf=False.
    compute_dtype=jnp.bfloat16 opts f32 inputs into bf16 MXU compute (f32 accumulation)."""
    N, D = x.shape
    C, D2 = w.shape
    assert D == D2
    assert x.dtype == w.dtype

    cdt = jnp.dtype(compute_dtype) if compute_dtype is not None else jnp.dtype(x.dtype)

    vmem_cap, n_cores = _tpu_vmem_and_cores()
    vmem_budget = (vmem_cap * 3) // 4          # leave headroom for Mosaic internal scratch

    Dp = _round_up(D, 128)

    # --- adaptive tile selection -------------------------------------------------------------
    if row_tile is None:
        row_tile = 1024 if cdt.itemsize <= 2 else 512    # bigger row tile on the bf16 path
    TM = min(_round_up(row_tile, 16), _round_up(N, 16))
    # v7x megacore: keep >= 2 row tiles (when there is enough work) so the "parallel" row axis
    # shards across both TensorCores instead of idling one.
    if n_cores > 1 and N >= 256 and _round_up(N, TM) // TM < 2:
        TM = _round_up(-(-N // 2), 16)
    TC = min(_round_up(class_tile, 128), _round_up(C, 128))

    x_bytes = jnp.dtype(x.dtype).itemsize
    w_bytes = cdt.itemsize
    xn_bytes = cdt.itemsize
    wf_bytes = x_bytes

    def fits(tm, tc):
        return _vmem_footprint(tm, tc, Dp, x_bytes, w_bytes, xn_bytes,
                               wf_bytes, return_wf) <= vmem_budget - (4 << 20)

    # Shrink class tile first (keeps W re-streams low), then the row tile, until we fit.
    while not fits(TM, TC) and TC > 128:
        TC = max(128, _round_up(TC // 2, 128))
    while not fits(TM, TC) and TM > 16:
        TM = max(16, _round_up(TM // 2, 16))
    # TODO(synk): for very large D (f32, D >= ~8k) even minimum tiles may exceed v7x's 64 MiB
    # VMEM; that case needs an extra K (feature) grid axis with an f32 (TM,TC) accumulator.

    Np = _round_up(N, TM)
    Cp = _round_up(C, TC)

    xp = jnp.pad(x, ((0, Np - N), (0, Dp - D)))
    # One-time pad + compute-dtype cast + transpose of W to (Dp, Cp): MXU-native RHS, no
    # per-tile XLU transposes.  Fused under this jit so XLA materializes a single copy.
    wt = jnp.pad(w, ((0, Cp - C), (0, Dp - D))).astype(cdt).T
    lbl = jnp.pad(labels.astype(jnp.int32), (0, Np - N)).reshape(Np, 1)

    kernel = _make_kernel(s=float(s), m=float(m), tc=TC,
                          n_pad_classes=Cp - C, with_wf=return_wf)

    l_spec = pl.BlockSpec((TM, 1), lambda i, j: (i, 0))     # per-row L (written at last j)
    l_struct = jax.ShapeDtypeStruct((Np, 1), jnp.float32)
    if return_wf:
        out_specs = [pl.BlockSpec((TM, TC), lambda i, j: (i, j)), l_spec]
        out_shape = (jax.ShapeDtypeStruct((Np, Cp), x.dtype), l_struct)
    else:
        out_specs = [l_spec]
        out_shape = (l_struct,)

    outs = pl.pallas_call(
        kernel,
        out_shape=out_shape,
        grid_spec=pltpu.PrefetchScalarGridSpec(
            num_scalar_prefetch=0,
            grid=(Np // TM, Cp // TC),                         # (row tiles, class tiles)
            in_specs=[
                pl.BlockSpec((TM, Dp), lambda i, j: (i, 0)),   # x: resident across j
                pl.BlockSpec((Dp, TC), lambda i, j: (0, j)),   # W.T: streamed over classes
                pl.BlockSpec((TM, 1), lambda i, j: (i, 0)),    # labels: resident across j
            ],
            out_specs=out_specs,
            scratch_shapes=[
                pltpu.VMEM((TM, Dp), cdt),            # normalized x rows (compute dtype -> MXU)
                pltpu.VMEM((TM, 128), jnp.float32),   # lane-wide target-logit accumulator
                pltpu.VMEM((TM, 128), jnp.float32),   # lane-wide sum_{j!=y} exp(s*wf) accumulator
            ],
        ),
        compiler_params=pltpu.CompilerParams(
            dimension_semantics=("parallel", "arbitrary"),
            vmem_limit_bytes=int(vmem_budget),
        ),
    )(xp, wt, lbl)

    if return_wf:
        wf_pad, l_pad = outs
        loss = -jnp.mean(l_pad[:N, 0])
        return loss, wf_pad[:N, :C]
    (l_pad,) = outs
    return -jnp.mean(l_pad[:N, 0])


def _reference(x, w, labels, *, s=30.0, m=0.4):
    """Pure-JAX reference mirroring the PyTorch forward (accurate f32 matmul)."""
    xn = x / jnp.maximum(jnp.linalg.norm(x, axis=1, keepdims=True), 1e-12)
    wf = jnp.dot(xn, w.T, precision=lax.Precision.HIGHEST)
    tgt = wf[jnp.arange(x.shape[0]), labels]
    numerator = s * (tgt - m)
    onehot = jax.nn.one_hot(labels, w.shape[0], dtype=bool)
    excl = jnp.sum(jnp.where(onehot, 0.0, jnp.exp(s * wf)), axis=1)
    L = numerator - jnp.log(jnp.exp(numerator) + excl)
    return -jnp.mean(L), wf


if __name__ == "__main__":
    key = jax.random.PRNGKey(0)

    # --- small exact-shape test (matches the module's expected small sizes) -------------------
    N, in_features, out_features = 8, 32, 16
    kx, kw, kl = jax.random.split(key, 3)
    x = jax.random.normal(kx, (N, in_features), dtype=jnp.float32)
    # nn.Linear(in, out, bias=False) weight: (out, in), U(-1/sqrt(in), 1/sqrt(in))
    bound = 1.0 / (in_features ** 0.5)
    w = jax.random.uniform(kw, (out_features, in_features), dtype=jnp.float32,
                           minval=-bound, maxval=bound)
    labels = jax.random.randint(kl, (N,), 0, out_features, dtype=jnp.int32)

    loss, wf = angular_penalty_sm_loss(x, w, labels)
    jax.block_until_ready((loss, wf))
    ref_loss, ref_wf = _reference(x, w, labels)
    assert wf.shape == (N, out_features)
    assert jnp.allclose(wf, ref_wf, atol=1e-5, rtol=1e-5)
    assert jnp.allclose(loss, ref_loss, atol=1e-4, rtol=1e-4)

    # loss-only path (skips the wf HBM writeback entirely)
    loss_only = angular_penalty_sm_loss(x, w, labels, return_wf=False)
    jax.block_until_ready(loss_only)
    assert jnp.allclose(loss_only, loss, atol=1e-6, rtol=1e-6)

    # --- multi-tile test: exercises row/class tiling, class padding and the accumulators ------
    N2, D2, C2 = 300, 200, 1000
    k2x, k2w, k2l = jax.random.split(jax.random.PRNGKey(0), 3)
    x2 = jax.random.normal(k2x, (N2, D2), dtype=jnp.float32)
    b2 = 1.0 / (D2 ** 0.5)
    w2 = jax.random.uniform(k2w, (C2, D2), dtype=jnp.float32, minval=-b2, maxval=b2)
    l2 = jax.random.randint(k2l, (N2,), 0, C2, dtype=jnp.int32)

    loss2, wf2 = angular_penalty_sm_loss(x2, w2, l2, row_tile=128, class_tile=256)
    jax.block_until_ready((loss2, wf2))
    ref_loss2, ref_wf2 = _reference(x2, w2, l2)
    assert wf2.shape == (N2, C2)
    assert jnp.allclose(wf2, ref_wf2, atol=1e-4, rtol=1e-4)
    assert jnp.allclose(loss2, ref_loss2, atol=1e-3, rtol=1e-3)

    # --- bf16 input path and bf16-compute path for f32 inputs (v6e/v7x fast path) -------------
    loss_bf16, wf_bf16 = angular_penalty_sm_loss(
        x.astype(jnp.bfloat16), w.astype(jnp.bfloat16), labels)
    jax.block_until_ready((loss_bf16, wf_bf16))
    assert wf_bf16.shape == (N, out_features) and bool(jnp.isfinite(loss_bf16))

    loss_c16, wf_c16 = angular_penalty_sm_loss(x, w, labels, compute_dtype=jnp.bfloat16)
    jax.block_until_ready((loss_c16, wf_c16))
    assert wf_c16.shape == (N, out_features) and bool(jnp.isfinite(loss_c16))

    print("KERNEL_OK")
</pallas_src>

<mosaic_0001>
module attributes {stable_mosaic.version = 11 : i64} {
  func.func @kernel(%arg0: i32, %arg1: i32, %arg2: memref<16x128xf32, #tpu.memory_space<vmem>>, %arg3: memref<128x128xf32, #tpu.memory_space<vmem>>, %arg4: memref<16x1xi32, #tpu.memory_space<vmem>>, %arg5: memref<16x128xf32, #tpu.memory_space<vmem>>, %arg6: memref<16x1xf32, #tpu.memory_space<vmem>>, %arg7: memref<16x128xf32, #tpu.memory_space<vmem>>, %arg8: memref<16x128xf32, #tpu.memory_space<vmem>>, %arg9: memref<16x128xf32, #tpu.memory_space<vmem>>) attributes {dimension_semantics = [#tpu.dimension_semantics<parallel>, #tpu.dimension_semantics<arbitrary>], iteration_bounds = array<i64: 1, 1>, scalar_prefetch = 0 : i64, scratch_operands = 3 : i64, tpu.core_type = #tpu.core_type<tc>, window_params = [{transform_indices = @transform_0, window_bounds = array<i64: 16, 128>}, {transform_indices = @transform_1, window_bounds = array<i64: 128, 128>}, {transform_indices = @transform_2, window_bounds = array<i64: 16, 1>}, {transform_indices = @transform_3, window_bounds = array<i64: 16, 128>}, {transform_indices = @transform_4, window_bounds = array<i64: 16, 1>}]} {
    %c0_i32 = arith.constant 0 : i32
    %0 = arith.cmpi eq, %arg1, %c0_i32 : i32
    %1 = arith.extui %0 : i1 to i32
    %c0_i32_0 = arith.constant 0 : i32
    %2 = arith.cmpi ne, %1, %c0_i32_0 : i32
    scf.if %2 {
      %c0_21 = arith.constant 0 : index
      %c0_22 = arith.constant 0 : index
      %30 = vector.load %arg2[%c0_21, %c0_22] : memref<16x128xf32, #tpu.memory_space<vmem>>, vector<16x128xf32>
      %31 = arith.mulf %30, %30 : vector<16x128xf32>
      %cst_23 = arith.constant dense<0.000000e+00> : vector<16xf32>
      %32 = vector.multi_reduction <add>, %31, %cst_23 [1] : vector<16x128xf32> to vector<16xf32>
      %33 = vector.shape_cast %32 : vector<16xf32> to vector<16x1xf32>
      %34 = math.sqrt %33 : vector<16x1xf32>
      %cst_24 = arith.constant 9.99999996E-13 : f32
      %35 = vector.broadcast %cst_24 : f32 to vector<16x1xf32>
      %36 = arith.maximumf %34, %35 : vector<16x1xf32>
      %cst_25 = arith.constant 1.000000e+00 : f32
      %37 = vector.broadcast %cst_25 : f32 to vector<16x1xf32>
      %38 = arith.divf %37, %36 : vector<16x1xf32>
      %39 = vector.broadcast %38 : vector<16x1xf32> to vector<16x128xf32>
      %40 = arith.mulf %30, %39 : vector<16x128xf32>
      %c0_26 = arith.constant 0 : index
      %c0_27 = arith.constant 0 : index
      %41 = vector.load %arg7[%c0_26, %c0_27] : memref<16x128xf32, #tpu.memory_space<vmem>>, vector<16x128xf32>
      tpu.vector_store %arg7[%c0_26, %c0_27], %40 {strides = array<i32>} : memref<16x128xf32, #tpu.memory_space<vmem>>, vector<16x128xf32>,
      %cst_28 = arith.constant 0.000000e+00 : f32
      %42 = vector.broadcast %cst_28 : f32 to vector<16x128xf32>
      %c0_29 = arith.constant 0 : index
      %c0_30 = arith.constant 0 : index
      %43 = vector.load %arg8[%c0_29, %c0_30] : memref<16x128xf32, #tpu.memory_space<vmem>>, vector<16x128xf32>
      tpu.vector_store %arg8[%c0_29, %c0_30], %42 {strides = array<i32>} : memref<16x128xf32, #tpu.memory_space<vmem>>, vector<16x128xf32>,
      %cst_31 = arith.constant 0.000000e+00 : f32
      %44 = vector.broadcast %cst_31 : f32 to vector<16x128xf32>
      %c0_32 = arith.constant 0 : index
      %c0_33 = arith.constant 0 : index
      %45 = vector.load %arg9[%c0_32, %c0_33] : memref<16x128xf32, #tpu.memory_space<vmem>>, vector<16x128xf32>
      tpu.vector_store %arg9[%c0_32, %c0_33], %44 {strides = array<i32>} : memref<16x128xf32, #tpu.memory_space<vmem>>, vector<16x128xf32>,
    } else {
    }
    %c0 = arith.constant 0 : index
    %c0_1 = arith.constant 0 : index
    %3 = vector.load %arg7[%c0, %c0_1] : memref<16x128xf32, #tpu.memory_space<vmem>>, vector<16x128xf32>
    %c0_2 = arith.constant 0 : index
    %c0_3 = arith.constant 0 : index
    %4 = vector.load %arg3[%c0_2, %c0_3] : memref<128x128xf32, #tpu.memory_space<vmem>>, vector<128x128xf32>
    %cst = arith.constant dense<0.000000e+00> : vector<16x128xf32>
    %5 = tpu.matmul %3, %4, %cst {dimension_numbers = #tpu.dot_dimension_numbers<[1], [0], [0], [1], [0, 0, 1, 1], [], []>} : vector<16x128xf32>, vector<128x128xf32>, vector<16x128xf32> -> vector<16x128xf32>
    %c0_4 = arith.constant 0 : index
    %c0_5 = arith.constant 0 : index
    %6 = vector.load %arg5[%c0_4, %c0_5] : memref<16x128xf32, #tpu.memory_space<vmem>>, vector<16x128xf32>
    tpu.vector_store %arg5[%c0_4, %c0_5], %5 {strides = array<i32>} : memref<16x128xf32, #tpu.memory_space<vmem>>, vector<16x128xf32>,
    %7 = tpu.iota {dimensions = array<i32: 1>} : vector<16x128xi32>
    %c0_6 = arith.constant 0 : index
    %c0_7 = arith.constant 0 : index
    %8 = vector.load %arg4[%c0_6, %c0_7] : memref<16x1xi32, #tpu.memory_space<vmem>>, vector<16x1xi32>
    %c128_i32 = arith.constant 128 : i32
    %9 = arith.muli %arg1, %c128_i32 : i32
    %10 = vector.broadcast %9 : i32 to vector<16x1xi32>
    %11 = arith.subi %8, %10 : vector<16x1xi32>
    %12 = vector.broadcast %11 : vector<16x1xi32> to vector<16x128xi32>
    %13 = arith.cmpi eq, %7, %12 : vector<16x128xi32>
    %cst_8 = arith.constant 3.000000e+01 : f32
    %14 = vector.broadcast %cst_8 : f32 to vector<16x128xf32>
    %15 = arith.mulf %14, %5 : vector<16x128xf32>
    %16 = math.exp %15 : vector<16x128xf32>
    %cst_9 = arith.constant 0.000000e+00 : f32
    %17 = vector.broadcast %cst_9 : f32 to vector<16x128xf32>
    %18 = arith.select %13, %17, %16 : vector<16x128xi1>, vector<16x128xf32>
    %cst_10 = arith.constant 0.000000e+00 : f32
    %19 = vector.broadcast %cst_10 : f32 to vector<16x128xf32>
    %20 = arith.select %13, %5, %19 : vector<16x128xi1>, vector<16x128xf32>
    %c0_11 = arith.constant 0 : index
    %c0_12 = arith.constant 0 : index
    %21 = vector.load %arg9[%c0_11, %c0_12] : memref<16x128xf32, #tpu.memory_space<vmem>>, vector<16x128xf32>
    %c0_13 = arith.constant 0 : index
    %c0_14 = arith.constant 0 : index
    %22 = vector.load %arg8[%c0_13, %c0_14] : memref<16x128xf32, #tpu.memory_space<vmem>>, vector<16x128xf32>
    %23 = arith.addf %21, %18 : vector<16x128xf32>
    %24 = arith.addf %22, %20 : vector<16x128xf32>
    %c0_15 = arith.constant 0 : index
    %c0_16 = arith.constant 0 : index
    %25 = vector.load %arg9[%c0_15, %c0_16] : memref<16x128xf32, #tpu.memory_space<vmem>>, vector<16x128xf32>
    tpu.vector_store %arg9[%c0_15, %c0_16], %23 {strides = array<i32>} : memref<16x128xf32, #tpu.memory_space<vmem>>, vector<16x128xf32>,
    %c0_17 = arith.constant 0 : index
    %c0_18 = arith.constant 0 : index
    %26 = vector.load %arg8[%c0_17, %c0_18] : memref<16x128xf32, #tpu.memory_space<vmem>>, vector<16x128xf32>
    tpu.vector_store %arg8[%c0_17, %c0_18], %24 {strides = array<i32>} : memref<16x128xf32, #tpu.memory_space<vmem>>, vector<16x128xf32>,
    %c0_i32_19 = arith.constant 0 : i32
    %27 = arith.cmpi eq, %arg1, %c0_i32_19 : i32
    %28 = arith.extui %27 : i1 to i32
    %c0_i32_20 = arith.constant 0 : i32
    %29 = arith.cmpi ne, %28, %c0_i32_20 : i32
    scf.if %29 {
      %c0_21 = arith.constant 0 : index
      %c0_22 = arith.constant 0 : index
      %30 = vector.load %arg8[%c0_21, %c0_22] : memref<16x128xf32, #tpu.memory_space<vmem>>, vector<16x128xf32>
      %cst_23 = arith.constant dense<0.000000e+00> : vector<16xf32>
      %31 = vector.multi_reduction <add>, %30, %cst_23 [1] : vector<16x128xf32> to vector<16xf32>
      %32 = vector.shape_cast %31 : vector<16xf32> to vector<16x1xf32>
      %c0_24 = arith.constant 0 : index
      %c0_25 = arith.constant 0 : index
      %33 = vector.load %arg9[%c0_24, %c0_25] : memref<16x128xf32, #tpu.memory_space<vmem>>, vector<16x128xf32>
      %cst_26 = arith.constant dense<0.000000e+00> : vector<16xf32>
      %34 = vector.multi_reduction <add>, %33, %cst_26 [1] : vector<16x128xf32> to vector<16xf32>
      %35 = vector.shape_cast %34 : vector<16xf32> to vector<16x1xf32>
      %cst_27 = arith.constant 1.120000e+02 : f32
      %36 = vector.broadcast %cst_27 : f32 to vector<16x1xf32>
      %37 = arith.subf %35, %36 : vector<16x1xf32>
      %cst_28 = arith.constant 4.000000e-01 : f32
      %38 = vector.broadcast %cst_28 : f32 to vector<16x1xf32>
      %39 = arith.subf %32, %38 : vector<16x1xf32>
      %cst_29 = arith.constant 3.000000e+01 : f32
      %40 = vector.broadcast %cst_29 : f32 to vector<16x1xf32>
      %41 = arith.mulf %40, %39 : vector<16x1xf32>
      %42 = math.exp %41 : vector<16x1xf32>
      %43 = arith.addf %42, %37 : vector<16x1xf32>
      %44 = math.log %43 : vector<16x1xf32>
      %45 = arith.subf %41, %44 : vector<16x1xf32>
      %c0_30 = arith.constant 0 : index
      %c0_31 = arith.constant 0 : index
      %46 = vector.load %arg6[%c0_30, %c0_31] : memref<16x1xf32, #tpu.memory_space<vmem>>, vector<16x1xf32>
      tpu.vector_store %arg6[%c0_30, %c0_31], %45 {strides = array<i32>} : memref<16x1xf32, #tpu.memory_space<vmem>>, vector<16x1xf32>,
    } else {
    }
    return
  }
  func.func @transform_0(%arg0: i32, %arg1: i32) -> (i32, i32) {
    %c0_i32 = arith.constant 0 : i32
    %c0_i32_0 = arith.constant 0 : i32
    return %arg0, %c0_i32 : i32, i32
  }
  func.func @transform_1(%arg0: i32, %arg1: i32) -> (i32, i32) {
    %c0_i32 = arith.constant 0 : i32
    %c0_i32_0 = arith.constant 0 : i32
    return %c0_i32, %arg1 : i32, i32
  }
  func.func @transform_2(%arg0: i32, %arg1: i32) -> (i32, i32) {
    %c0_i32 = arith.constant 0 : i32
    %c0_i32_0 = arith.constant 0 : i32
    return %arg0, %c0_i32 : i32, i32
  }
  func.func @transform_3(%arg0: i32, %arg1: i32) -> (i32, i32) {
    %c0_i32 = arith.constant 0 : i32
    return %arg0, %arg1 : i32, i32
  }
  func.func @transform_4(%arg0: i32, %arg1: i32) -> (i32, i32) {
    %c0_i32 = arith.constant 0 : i32
    %c0_i32_0 = arith.constant 0 : i32
    return %arg0, %c0_i32 : i32, i32
  }
}

</mosaic_0001>

<llo_original>
// kernel: angular_penalty_sm_loss.1
$region0: #{angular_penalty_sm_loss.1}
  #allocation0 [shape = 'u32[]', space=smem, size = 0x4, offset = 0x4, fixed_abs, tag = 'smem constant byte address 0x4 - core index']
  #allocation1 [shape = 'u32[144,128]{1,0:T(1,128)}', space=vmem, size = 0x12000, scoped, tag = 'internal scratch']
  #allocation2 [shape = 'f32[16,128]{1,0:T(8,128)}', space=vmem, size = 0x2000, scoped, tag = 'scratch operand']
  #allocation3 [shape = 'f32[16,128]{1,0:T(8,128)}', space=vmem, size = 0x2000, scoped, tag = 'scratch operand']
  #allocation4 [shape = 'f32[16,128]{1,0:T(8,128)}', space=vmem, size = 0x2000, scoped, tag = 'scratch operand']
  %s0 = inlined_call_operand.vmem [shape: f32[16,128], index: 0, kind: input, shape index: {}]
  %s1 = inlined_call_operand.vmem [shape: f32[128,128], index: 1, kind: input, shape index: {}]
  %s2 = inlined_call_operand.vmem [shape: s32[16,1], index: 2, kind: input, shape index: {}]
  %s3 = inlined_call_operand.vmem [shape: f32[16,128], index: 3, kind: output, shape index: {0}]
  %s4 = inlined_call_operand.vmem [shape: f32[16,1], index: 4, kind: output, shape index: {1}]
  %5 = xla_tuple %s3, %s4
  %s6 = sld [smem:[#allocation0]]
  $region38: #{angular_penalty_sm_loss.1} parent=0
    _
  %s8 = ssub.s32 1, %s6
  %s9 = scalar_select 0, %s8, %s6
  // Predicated region
  $region2: #{angular_penalty_sm_loss.1} parent=0 // pred_check
    _
  $region3: #{angular_penalty_sm_loss.1} parent=0 // pred_check_branch
    %11 = sbr.rel (0) target = $region5
  $region4: #{angular_penalty_sm_loss.1} parent=0 // pred_region
    _
  $region5: #{angular_penalty_sm_loss.1} parent=0 // pred_fallthru
    _
  // Predicated region
  $region6: #{angular_penalty_sm_loss.1} parent=0 // pred_check
    _
  $region7: #{angular_penalty_sm_loss.1} parent=0 // pred_check_branch
    %13 = sbr.rel (0) target = $region9
  $region8: #{angular_penalty_sm_loss.1} parent=0 // pred_region
    _
  $region9: #{angular_penalty_sm_loss.1} parent=0 // pred_fallthru
    _
  // Predicated region
  $region10: #{angular_penalty_sm_loss.1} parent=0 // pred_check
    _
  $region11: #{angular_penalty_sm_loss.1} parent=0 // pred_check_branch
    %15 = sbr.rel (0) target = $region13
  $region12: #{angular_penalty_sm_loss.1} parent=0 // pred_region
    _
  $region13: #{angular_penalty_sm_loss.1} parent=0 // pred_fallthru
    _
  %p16 = scmp.eq.s32.totalorder 0, 0
  // Predicated region
  $region14: #{angular_penalty_sm_loss.1} parent=0 // pred_check
    %p17 = pneg %p16
  $region15: #{angular_penalty_sm_loss.1} parent=0 // pred_check_branch
    %19 = sbr.rel (%p17) target = $region17
  $region16: #{angular_penalty_sm_loss.1} parent=0 // pred_region
    %v20 = vld [vmem:[%s0] sm:$0xff]
    %v21 = vld [vmem:[%s0 + $0x8] sm:$0xff]
    %v22 = vmul.f32 %v20, %v20
    %v23 = vmul.f32 %v21, %v21
    %24 = vadd.xlane.f32.xlu0 %v22
    %v25 = vpop.xlane.xlu0 %24
    %26 = vadd.xlane.f32.xlu0 %v23
    %v27 = vpop.xlane.xlu0 %26
    %v28 = vrsqrt.pop %v25
    %v29 = vmul.f32 %v25, %v28
    %vm30 = vcmp.eq.f32.partialorder %v25, inf
    %v31 = vsel %vm30, %v25, %v29
    %vm32 = vcmp.eq.f32.partialorder %v25, 0.0
    %v33 = vand.u32 %v25, 2147483648
    %v34 = vsel %vm32, %v33, %v31
    %v35 = vrsqrt.pop %v27
    %v36 = vmul.f32 %v27, %v35
    %vm37 = vcmp.eq.f32.partialorder %v27, inf
    %v38 = vsel %vm37, %v27, %v36
    %vm39 = vcmp.eq.f32.partialorder %v27, 0.0
    %v40 = vand.u32 %v27, 2147483648
    %v41 = vsel %vm39, %v40, %v38
    %v42 = vmax.f32 %v34, 1e-12
    %v43 = vmax.f32 %v41, 1e-12
    %v44 = vrcp.pop %v42
    %v45 = vmul.f32 1.0, %v44
    %v46 = vrcp.pop %v43
    %v47 = vmul.f32 1.0, %v46
    %v48 = vmul.f32 %v20, %v45
    %v49 = vmul.f32 %v21, %v47
    %50 = vst [vmem:[#allocation2] sm:$0xff] %v48
    %51 = vst [vmem:[#allocation2 + $0x8] sm:$0xff] %v49
    %52 = vst [vmem:[#allocation3] sm:$0xff] 0.0
    %53 = vst [vmem:[#allocation3 + $0x8] sm:$0xff] 0.0
    %54 = vst [vmem:[#allocation4] sm:$0xff] 0.0
    %55 = vst [vmem:[#allocation4 + $0x8] sm:$0xff] 0.0
  $region17: #{angular_penalty_sm_loss.1} parent=0 // pred_fallthru
    _
  %v56 = vld [vmem:[#allocation2] sm:$0xff]
  %v57 = vld [vmem:[#allocation2 + $0x8] sm:$0xff]
  %v58 = vld [vmem:[%s1] sm:$0xff]
  %v59 = vld [vmem:[%s1 + $0x8] sm:$0xff]
  %v60 = vld [vmem:[%s1 + $0x10] sm:$0xff]
  %v61 = vld [vmem:[%s1 + $0x18] sm:$0xff]
  %v62 = vld [vmem:[%s1 + $0x20] sm:$0xff]
  %v63 = vld [vmem:[%s1 + $0x28] sm:$0xff]
  %v64 = vld [vmem:[%s1 + $0x30] sm:$0xff]
  %v65 = vld [vmem:[%s1 + $0x38] sm:$0xff]
  %v66 = vld [vmem:[%s1 + $0x40] sm:$0xff]
  %v67 = vld [vmem:[%s1 + $0x48] sm:$0xff]
  %v68 = vld [vmem:[%s1 + $0x50] sm:$0xff]
  %v69 = vld [vmem:[%s1 + $0x58] sm:$0xff]
  %v70 = vld [vmem:[%s1 + $0x60] sm:$0xff]
  %v71 = vld [vmem:[%s1 + $0x68] sm:$0xff]
  %v72 = vld [vmem:[%s1 + $0x70] sm:$0xff]
  %v73 = vld [vmem:[%s1 + $0x78] sm:$0xff]
  %74 = vmatprep.subr.mxu0 0.0
  %75 = vmatpush1.msra.mxu0 %v58
  %76 = vmatprep.subr.mxu0 0.0
  %77 = vmatpush1.msra.mxu0 %v59
  %78 = vmatprep.subr.mxu0 0.0
  %79 = vmatpush1.msra.mxu0 %v60
  %80 = vmatprep.subr.mxu0 0.0
  %81 = vmatpush1.msra.mxu0 %v61
  %82 = vmatprep.subr.mxu0 0.0
  %83 = vmatpush1.msra.mxu0 %v62
  %84 = vmatprep.subr.mxu0 0.0
  %85 = vmatpush1.msra.mxu0 %v63
  %86 = vmatprep.subr.mxu0 0.0
  %87 = vmatpush1.msra.mxu0 %v64
  %88 = vmatprep.subr.mxu0 0.0
  %89 = vmatpush1.msra.mxu0 %v65
  %90 = vmatprep.subr.mxu0 0.0
  %91 = vmatpush1.msra.mxu0 %v66
  %92 = vmatprep.subr.mxu0 0.0
  %93 = vmatpush1.msra.mxu0 %v67
  %94 = vmatprep.subr.mxu0 0.0
  %95 = vmatpush1.msra.mxu0 %v68
  %96 = vmatprep.subr.mxu0 0.0
  %97 = vmatpush1.msra.mxu0 %v69
  %98 = vmatprep.subr.mxu0 0.0
  %99 = vmatpush1.msra.mxu0 %v70
  %100 = vmatprep.subr.mxu0 0.0
  %101 = vmatpush1.msra.mxu0 %v71
  %102 = vmatprep.subr.mxu0 0.0
  %103 = vmatpush1.msra.mxu0 %v72
  %104 = vmatprep.subr.mxu0 0.0
  %105 = vmatpush1.msra.mxu0 %v73
  %106 = vmatprep.subr.mxu0 0.0
  %107 = vmatpush1.msra.mxu0 0.0
  %108 = vmatprep.subr.mxu0 0.0
  %109 = vmatpush1.msra.mxu0 0.0
  %110 = vmatprep.subr.mxu0 0.0
  %111 = vmatpush1.msra.mxu0 0.0
  %112 = vmatprep.subr.mxu0 0.0
  %113 = vmatpush1.msra.mxu0 0.0
  %114 = vmatprep.subr.mxu0 0.0
  %115 = vmatpush1.msra.mxu0 0.0
  %116 = vmatprep.subr.mxu0 0.0
  %117 = vmatpush1.msra.mxu0 0.0
  %118 = vmatprep.subr.mxu0 0.0
  %119 = vmatpush1.msra.mxu0 0.0
  %120 = vmatprep.subr.mxu0 0.0
  %121 = vmatpush1.msra.mxu0 0.0
  %122 = vmatprep.subr.mxu0 0.0
  %123 = vmatpush1.msra.mxu0 0.0
  %124 = vmatprep.subr.mxu0 0.0
  %125 = vmatpush1.msra.mxu0 0.0
  %126 = vmatprep.subr.mxu0 0.0
  %127 = vmatpush1.msra.mxu0 0.0
  %128 = vmatprep.subr.mxu0 0.0
  %129 = vmatpush1.msra.mxu0 0.0
  %130 = vmatprep.subr.mxu0 0.0
  %131 = vmatpush1.msra.mxu0 0.0
  %132 = vmatprep.subr.mxu0 0.0
  %133 = vmatpush1.msra.mxu0 0.0
  %134 = vmatprep.subr.mxu0 0.0
  %135 = vmatpush1.msra.mxu0 0.0
  %136 = vmatprep.subr.mxu0 0.0
  %137 = vmatpush1.msra.mxu0 0.0
  %138 = vmatprep.mubr.f32.mxu0 0.0
  %139 = vmatmul.mubr.f32.gmra.mrb[0].mxu0 %v56
  %v140 = vpop.f32.mrb[0].mxu0
  %v141 = vadd.f32 0.0, %v140
  %v142 = vpop.f32.mrb[0].mxu0
  %143 = vmatprep.mubr.f32.mxu0 0.0
  %144 = vmatmul.mubr.f32.gmra.mrb[0].mxu0 %v57
  %v145 = vpop.f32.mrb[0].mxu0
  %v146 = vadd.f32 0.0, %v145
  %v147 = vpop.f32.mrb[0].mxu0
  %148 = vdwg.mxu0
  %149 = vst [vmem:[%s3] sm:$0xff] %v141
  %150 = vst [vmem:[%s3 + $0x8] sm:$0xff] %v146
  %v151 = vlaneseq
  %v152 = vand.u32 %v151, 127
  %v153 = vld [vmem:[%s2] sm:$0xff]
  %v154 = vld [vmem:[%s2 + $0x8] sm:$0xff]
  %s155 = smul.u32 0, 128
  %v156 = vstv %s155
  %v157 = vsub.s32 %v153, %v156
  %v158 = vsub.s32 %v154, %v156
  %159 = vset.pattern.permute.xlu0 0
  %160 = vperm.xlu0 %159, %v157
  %v161 = vpop.permute.xlu0 %160
  %162 = vset.pattern.permute.xlu0 0
  %163 = vperm.xlu0 %162, %v158
  %v164 = vpop.permute.xlu0 %163
  %vm165 = vcmp.eq.s32.totalorder %v152, %v161
  %vm166 = vcmp.eq.s32.totalorder %v152, %v164
  %v167 = vmul.f32 %v141, 30.0
  %v168 = vmul.f32 %v146, 30.0
  %v169 = vmul.f32 %v167, 1.442695
  %v170 = vpow.pop %v169
  %v171 = vmul.f32 %v168, 1.442695
  %v172 = vpow.pop %v171
  %v173 = vsel %vm165, 0.0, %v170
  %v174 = vsel %vm166, 0.0, %v172
  %v175 = vsel %vm165, %v141, 0.0
  %v176 = vsel %vm166, %v146, 0.0
  %v177 = vld [vmem:[#allocation4] sm:$0xff]
  %v178 = vld [vmem:[#allocation4 + $0x8] sm:$0xff]
  %v179 = vld [vmem:[#allocation3] sm:$0xff]
  %v180 = vld [vmem:[#allocation3 + $0x8] sm:$0xff]
  %v181 = vadd.f32 %v177, %v173
  %v182 = vadd.f32 %v178, %v174
  %v183 = vadd.f32 %v179, %v175
  %v184 = vadd.f32 %v180, %v176
  %185 = vst [vmem:[#allocation4] sm:$0xff] %v181
  %186 = vst [vmem:[#allocation4 + $0x8] sm:$0xff] %v182
  %187 = vst [vmem:[#allocation3] sm:$0xff] %v183
  %188 = vst [vmem:[#allocation3 + $0x8] sm:$0xff] %v184
  // Predicated region
  $region18: #{angular_penalty_sm_loss.1} parent=0 // pred_check
    %p189 = pneg %p16
  $region19: #{angular_penalty_sm_loss.1} parent=0 // pred_check_branch
    %191 = sbr.rel (%p189) target = $region21
  $region20: #{angular_penalty_sm_loss.1} parent=0 // pred_region
    %v192 = vld [vmem:[#allocation3] sm:$0xff]
    %v193 = vld [vmem:[#allocation3 + $0x8] sm:$0xff]
    %194 = vadd.xlane.f32.xlu0 %v192
    %v195 = vpop.xlane.xlu0 %194
    %196 = vadd.xlane.f32.xlu0 %v193
    %v197 = vpop.xlane.xlu0 %196
    %v198 = vld [vmem:[#allocation4] sm:$0xff]
    %v199 = vld [vmem:[#allocation4 + $0x8] sm:$0xff]
    %200 = vadd.xlane.f32.xlu0 %v198
    %v201 = vpop.xlane.xlu0 %200
    %202 = vadd.xlane.f32.xlu0 %v199
    %v203 = vpop.xlane.xlu0 %202
    %v204 = vsub.f32 %v201, 112.0
    %v205 = vsub.f32 %v203, 112.0
    %v206 = vsub.f32 %v195, 0.4
    %v207 = vsub.f32 %v197, 0.4
    %v208 = vmul.f32 %v206, 30.0
    %v209 = vmul.f32 %v207, 30.0
    %v210 = vmul.f32 %v208, 1.442695
    %v211 = vpow.pop %v210
    %v212 = vmul.f32 %v209, 1.442695
    %v213 = vpow.pop %v212
    %v214 = vadd.f32 %v211, %v204
    %v215 = vadd.f32 %v213, %v205
    %v216 = vlog2.pop %v214
    %v217 = vmul.f32 %v216, 0.6931472
    %v218 = vlog2.pop %v215
    %v219 = vmul.f32 %v218, 0.6931472
    %v220 = vsub.f32 %v208, %v217
    %v221 = vsub.f32 %v209, %v219
    %vm222 = vcmask 7168
    %223 = vst.msk [vmem:[%s4] sm:$0xff] %vm222, %v220
    %224 = vst.msk [vmem:[%s4 + $0x8] sm:$0xff] %vm222, %v221
  $region21: #{angular_penalty_sm_loss.1} parent=0 // pred_fallthru
    _
  // Predicated region
  $region22: #{angular_penalty_sm_loss.1} parent=0 // pred_check
    _
  $region23: #{angular_penalty_sm_loss.1} parent=0 // pred_check_branch
    %226 = sbr.rel (0) target = $region25
  $region24: #{angular_penalty_sm_loss.1} parent=0 // pred_region
    _
  $region25: #{angular_penalty_sm_loss.1} parent=0 // pred_fallthru
    _
  // Predicated region
  $region26: #{angular_penalty_sm_loss.1} parent=0 // pred_check
    _
  $region27: #{angular_penalty_sm_loss.1} parent=0 // pred_check_branch
    %228 = sbr.rel (0) target = $region29
  $region28: #{angular_penalty_sm_loss.1} parent=0 // pred_region
    _
  $region29: #{angular_penalty_sm_loss.1} parent=0 // pred_fallthru
    _
  // Predicated region
  $region30: #{angular_penalty_sm_loss.1} parent=0 // pred_check
    _
  $region31: #{angular_penalty_sm_loss.1} parent=0 // pred_check_branch
    %230 = sbr.rel (0) target = $region33
  $region32: #{angular_penalty_sm_loss.1} parent=0 // pred_region
    _
  $region33: #{angular_penalty_sm_loss.1} parent=0 // pred_fallthru
    _
  // Predicated region
  $region34: #{angular_penalty_sm_loss.1} parent=0 // pred_check
    _
  $region35: #{angular_penalty_sm_loss.1} parent=0 // pred_check_branch
    %232 = sbr.rel (0) target = $region37
  $region36: #{angular_penalty_sm_loss.1} parent=0 // pred_region
    _
  $region37: #{angular_penalty_sm_loss.1} parent=0 // pred_fallthru
    _

</llo_original>
